<compile_context>
chip_gen: v5e
topology: v5e:2x2
jax: 0.10.0
libtpu: 0.0.40
codegen_flags: <defaults>
</compile_context>

<pallas_src>
import jax
import jax.numpy as jnp
from jax.experimental import pallas as pl
from jax.experimental.pallas import tpu as pltpu

ALPHA = 0.3
BETA = 0.3
N_QUEUES = 2
SENTINEL = 1000.0


def _round_up(x, m):
    return ((x + m - 1) // m) * m


def _vmem_capacity_bytes():
    """Best-effort VMEM capacity query; falls back to v7x's 64 MiB/TC."""
    try:
        info = pltpu.get_tpu_info()
        cap = getattr(info, "vmem_capacity_bytes", None)
        if cap:
            return int(cap)
    except Exception:
        pass
    return 64 * 1024 * 1024


def _make_kernel(D, Dp, C, Cpp, Wq):
    """Kernel closure over the static column layout."""

    def kernel(lamb_ref,               # scalar prefetch (SMEM), shape (1,)
               idx_ref,                # (TB, 1) int32: idxa * n_queues + idxnq
               fR_ref, fA_ref,         # (TB, D)
               lab_ref,                # (TB, Cpp): labels | labelsD | 0-pad
               qt_ref,                 # (CNp, 2*Wq) bf16: hi table | lo table
               fR_o, fA_o, lab_o):     # (TB, D), (TB, D), (TB, Cpp)
        lamb = lamb_ref[0]
        one_m = 1.0 - lamb

        tb = idx_ref.shape[0]
        cnp = qt_ref.shape[0]

        # One-hot gather of queue rows on the MXU.  Two DEFAULT-precision
        # bf16 passes (hi + lo split of the f32 table) with f32 accumulation:
        # exact for the 1000.0 sentinel, ~4e-6 rel error otherwise.
        # TODO(synk): out-of-range idxa/idxnq yield an all-zero one-hot row
        # (gather -> 0) instead of PyTorch's index error.
        onehot = (idx_ref[...] ==
                  jax.lax.broadcasted_iota(jnp.int32, (tb, cnp), 1)
                  ).astype(jnp.float32).astype(jnp.bfloat16)
        q_hi = qt_ref[:, :Wq]
        q_lo = qt_ref[:, Wq:]
        gathered = (jnp.dot(onehot, q_hi, preferred_element_type=jnp.float32)
                    + jnp.dot(onehot, q_lo, preferred_element_type=jnp.float32))

        # feature mixup:  x * lamb + (1 - lamb) * xQ[idxa, idxnq]
        fR_o[...] = fR_ref[...] * lamb + one_m * gathered[:, :D]
        fA_o[...] = fA_ref[...] * lamb + one_m * gathered[:, Dp:Dp + D]

        # fused label slab:  columns [0,C) -> plain mixup,
        #                    columns [C,2C) -> distance-sentinel mixup.
        lab = lab_ref[...]
        gq = gathered[:, 2 * Dp:2 * Dp + Cpp]
        mix = lab * lamb + one_m * gq
        eq_d = lab == SENTINEL
        eq_dq = gq == SENTINEL
        sent = jnp.where(
            eq_d,
            jnp.where(eq_dq, jnp.float32(SENTINEL), gq),
            jnp.where(eq_dq, lab, mix),
        )
        col = jax.lax.broadcasted_iota(jnp.int32, lab.shape, 1)
        lab_o[...] = jnp.where(col < C, mix, sent)

    return kernel


@jax.jit
def mixup_yolo_pallas(featR, featRQ, featA, featAQ,
                      labels, labelsQ, labelsD, labelsDQ,
                      lamb, idxa, idxnq):
    b, D = featR.shape
    C = labels.shape[-1]
    classes, n_queues = featRQ.shape[0], featRQ.shape[1]
    CN = classes * n_queues
    CNp = _round_up(CN, 8)                 # sublane-aligned contraction dim
    Dp = _round_up(D, 128)                 # 128-aligned feature columns in table
    Cpp = _round_up(2 * C, 128)            # fused lane-dense label slab width
    Wq = 2 * Dp + Cpp                      # fused queue-table width

    f32 = jnp.float32
    fR = featR if featR.dtype == f32 else featR.astype(f32)
    fA = featA if featA.dtype == f32 else featA.astype(f32)

    # Fused label slab: [labels | labelsD | 0-pad] along lanes (tiny copy).
    lab_pack = jnp.pad(
        jnp.concatenate([labels.astype(f32), labelsD.astype(f32)], axis=1),
        ((0, 0), (0, Cpp - 2 * C)))

    # Fused queue table (CN rows are tiny): cols [0,D)=featRQ, [Dp,Dp+D)=featAQ,
    # [2Dp,2Dp+C)=labelsQ, [2Dp+C,2Dp+2C)=labelsDQ, zeros elsewhere.
    def padw(x, w):
        return jnp.pad(x, ((0, 0), (0, w - x.shape[1])))

    qrows = jnp.concatenate([
        padw(featRQ.reshape(CN, D).astype(f32), Dp),
        padw(featAQ.reshape(CN, D).astype(f32), Dp),
        padw(jnp.concatenate([labelsQ.reshape(CN, C).astype(f32),
                              labelsDQ.reshape(CN, C).astype(f32)], axis=1), Cpp),
    ], axis=1)
    qrows = jnp.pad(qrows, ((0, CNp - CN), (0, 0)))          # (CNp, Wq) f32
    qt_hi = qrows.astype(jnp.bfloat16)
    qt_lo = (qrows - qt_hi.astype(f32)).astype(jnp.bfloat16)
    qt_split = jnp.concatenate([qt_hi, qt_lo], axis=1)       # (CNp, 2*Wq) bf16

    flat_idx = (idxa.astype(jnp.int32) * n_queues
                + idxnq.astype(jnp.int32)).reshape(b, 1)

    # --- tile sizing (generation-aware via VMEM capacity) ---
    vmem_cap = _vmem_capacity_bytes()
    row_bytes = 4 * (4 * D + 2 * Cpp + 1)          # in+out VMEM bytes per batch row
    resident_bytes = 2 * CNp * (2 * Wq) * 2        # double-buffered bf16 queue table
    budget = int(vmem_cap * 0.5)                   # headroom for compiler scratch
    tb_cap = max(8, min(1024,
                        ((budget - resident_bytes) // (2 * row_bytes)) // 8 * 8))
    if b <= 8:
        TB = b                                     # single full-extent tile
    else:
        # >= 4 grid steps when the batch allows (v7x megacore + pipelining),
        # capped by the VMEM-derived row budget; ragged last tile is clipped.
        TB = max(8, min(tb_cap, _round_up(pl.cdiv(b, 4), 8)))
    grid = (pl.cdiv(b, TB),)

    need = 2 * TB * row_bytes + resident_bytes
    vmem_limit = int(min(int(vmem_cap * 0.75), max(need + (8 << 20), 32 << 20)))

    def row_spec(w):
        return pl.BlockSpec((TB, w), lambda i, lamb_ref: (i, 0))

    in_specs = [
        row_spec(1),                                            # flat_idx
        row_spec(D),                                            # featR
        row_spec(D),                                            # featA
        row_spec(Cpp),                                          # fused label slab
        pl.BlockSpec((CNp, 2 * Wq), lambda i, lamb_ref: (0, 0)),  # resident table
    ]
    out_specs = [row_spec(D), row_spec(D), row_spec(Cpp)]
    out_shape = [
        jax.ShapeDtypeStruct((b, D), f32),
        jax.ShapeDtypeStruct((b, D), f32),
        jax.ShapeDtypeStruct((b, Cpp), f32),
    ]

    kernel = _make_kernel(D, Dp, C, Cpp, Wq)
    fR_o, fA_o, labpack_o = pl.pallas_call(
        kernel,
        out_shape=out_shape,
        grid_spec=pltpu.PrefetchScalarGridSpec(
            num_scalar_prefetch=1,
            grid=grid,
            in_specs=in_specs,
            out_specs=out_specs,
        ),
        compiler_params=pltpu.CompilerParams(
            dimension_semantics=("parallel",),
            vmem_limit_bytes=vmem_limit,
        ),
    )(lamb.astype(f32).reshape(1), flat_idx, fR, fA, lab_pack, qt_split)

    return fR_o, fA_o, labpack_o[:, :C], labpack_o[:, C:2 * C]


def mixup_yolo_ref(featR, featRQ, featA, featAQ,
                   labels, labelsQ, labelsD, labelsDQ,
                   lamb, idxa, idxnq):
    """Pure-JAX reference mirroring the PyTorch forward."""
    lam = lamb[0]
    fRQg = featRQ[idxa, idxnq]
    fAQg = featAQ[idxa, idxnq]
    labQg = labelsQ[idxa, idxnq]
    labDQg = labelsDQ[idxa, idxnq]
    featR_o = featR * lam + (1 - lam) * fRQg
    featA_o = featA * lam + (1 - lam) * fAQg
    labels_o = labels * lam + (1 - lam) * labQg
    eq_d = labelsD == SENTINEL
    eq_dq = labDQg == SENTINEL
    labelsD_o = ((eq_d & eq_dq) * SENTINEL
                 + (eq_d & ~eq_dq) * labDQg
                 + (~eq_d & eq_dq) * labelsD
                 + (~eq_d & ~eq_dq) * (labelsD * lam + (1 - lam) * labDQg))
    return featR_o, featA_o, labels_o, labelsD_o


if __name__ == "__main__":
    key = jax.random.PRNGKey(0)
    ks = jax.random.split(key, 12)

    b = 16         # batch (len(labels)) -> TB=8, 2 grid steps
    classes = 8    # label width == queue first dim
    D = 128        # feature width

    featR = jax.random.normal(ks[0], (b, D), jnp.float32)
    featRQ = jax.random.normal(ks[1], (classes, N_QUEUES, D), jnp.float32)
    featA = jax.random.normal(ks[2], (b, D), jnp.float32)
    featAQ = jax.random.normal(ks[3], (classes, N_QUEUES, D), jnp.float32)
    labels = jax.random.uniform(ks[4], (b, classes), jnp.float32)
    labelsQ = jax.random.uniform(ks[5], (classes, N_QUEUES, classes), jnp.float32)

    # distance-style labels: mixture of real values and the 1000 sentinel so
    # every branch of the sentinel logic is exercised
    labelsD_raw = jax.random.uniform(ks[6], (b, classes), jnp.float32) * 10.0
    labelsD = jnp.where(jax.random.bernoulli(ks[7], 0.4, (b, classes)),
                        jnp.float32(SENTINEL), labelsD_raw)
    labelsDQ_raw = jax.random.uniform(ks[8], (classes, N_QUEUES, classes),
                                      jnp.float32) * 10.0
    labelsDQ = jnp.where(
        jax.random.bernoulli(ks[9], 0.4, (classes, N_QUEUES, classes)),
        jnp.float32(SENTINEL), labelsDQ_raw)

    # stochastic bits of forward(), sampled deterministically in glue
    lamb = jax.random.beta(ks[10], ALPHA, BETA, (1,)).astype(jnp.float32)
    k_a, k_q = jax.random.split(ks[11])
    idxa = jax.random.randint(k_a, (b,), 0, classes, jnp.int32)
    idxnq = jax.random.randint(k_q, (b,), 0, N_QUEUES, jnp.int32)

    outs = mixup_yolo_pallas(featR, featRQ, featA, featAQ,
                             labels, labelsQ, labelsD, labelsDQ,
                             lamb, idxa, idxnq)
    outs = jax.block_until_ready(outs)

    refs = mixup_yolo_ref(featR, featRQ, featA, featAQ,
                          labels, labelsQ, labelsD, labelsDQ,
                          lamb, idxa, idxnq)

    for o, r in zip(outs, refs):
        assert o.shape == r.shape and o.dtype == r.dtype
        assert bool(jnp.allclose(o, r, atol=1e-4, rtol=1e-4))

    print("KERNEL_OK")
</pallas_src>

<mosaic_0001>
module attributes {stable_mosaic.version = 11 : i64} {
  func.func @kernel(%arg0: i32, %arg1: memref<1xf32, #tpu.memory_space<smem>>, %arg2: memref<8x1xi32, #tpu.memory_space<vmem>>, %arg3: memref<8x128xf32, #tpu.memory_space<vmem>>, %arg4: memref<8x128xf32, #tpu.memory_space<vmem>>, %arg5: memref<8x128xf32, #tpu.memory_space<vmem>>, %arg6: memref<16x768xbf16, #tpu.memory_space<vmem>>, %arg7: memref<8x128xf32, #tpu.memory_space<vmem>>, %arg8: memref<8x128xf32, #tpu.memory_space<vmem>>, %arg9: memref<8x128xf32, #tpu.memory_space<vmem>>) attributes {dimension_semantics = [#tpu.dimension_semantics<parallel>], iteration_bounds = array<i64: 2>, scalar_prefetch = 1 : i64, scratch_operands = 0 : i64, tpu.core_type = #tpu.core_type<tc>, window_params = [{transform_indices = @transform_0, window_bounds = array<i64: 8, 1>}, {transform_indices = @transform_1, window_bounds = array<i64: 8, 128>}, {transform_indices = @transform_2, window_bounds = array<i64: 8, 128>}, {transform_indices = @transform_3, window_bounds = array<i64: 8, 128>}, {pipeline_mode = #tpu.pipeline_mode<synchronous>, transform_indices = @transform_4, window_bounds = array<i64: 16, 768>}, {transform_indices = @transform_5, window_bounds = array<i64: 8, 128>}, {transform_indices = @transform_6, window_bounds = array<i64: 8, 128>}, {transform_indices = @transform_7, window_bounds = array<i64: 8, 128>}]} {
    %c0 = arith.constant 0 : index
    %0 = memref.load %arg1[%c0] : memref<1xf32, #tpu.memory_space<smem>>
    %cst = arith.constant 1.000000e+00 : f32
    %1 = arith.subf %cst, %0 : f32
    %c0_0 = arith.constant 0 : index
    %c0_1 = arith.constant 0 : index
    %2 = vector.load %arg2[%c0_0, %c0_1] : memref<8x1xi32, #tpu.memory_space<vmem>>, vector<8x1xi32>
    %3 = tpu.iota {dimensions = array<i32: 1>} : vector<8x16xi32>
    %4 = vector.broadcast %2 : vector<8x1xi32> to vector<8x16xi32>
    %5 = arith.cmpi eq, %4, %3 : vector<8x16xi32>
    %6 = arith.extui %5 : vector<8x16xi1> to vector<8x16xi32>
    %7 = arith.sitofp %6 : vector<8x16xi32> to vector<8x16xf32>
    %8 = arith.truncf %7 : vector<8x16xf32> to vector<8x16xbf16>
    %c0_2 = arith.constant 0 : index
    %c0_3 = arith.constant 0 : index
    %9 = vector.load %arg6[%c0_2, %c0_3] : memref<16x768xbf16, #tpu.memory_space<vmem>>, vector<16x384xbf16>
    %c0_4 = arith.constant 0 : index
    %c384 = arith.constant 384 : index
    %10 = vector.load %arg6[%c0_4, %c384] : memref<16x768xbf16, #tpu.memory_space<vmem>>, vector<16x384xbf16>
    %cst_5 = arith.constant dense<0.000000e+00> : vector<8x384xf32>
    %11 = tpu.matmul %8, %9, %cst_5 {dimension_numbers = #tpu.dot_dimension_numbers<[1], [0], [0], [1], [0, 0, 1, 1], [], []>} : vector<8x16xbf16>, vector<16x384xbf16>, vector<8x384xf32> -> vector<8x384xf32>
    %cst_6 = arith.constant dense<0.000000e+00> : vector<8x384xf32>
    %12 = tpu.matmul %8, %10, %cst_6 {dimension_numbers = #tpu.dot_dimension_numbers<[1], [0], [0], [1], [0, 0, 1, 1], [], []>} : vector<8x16xbf16>, vector<16x384xbf16>, vector<8x384xf32> -> vector<8x384xf32>
    %13 = arith.addf %11, %12 : vector<8x384xf32>
    %c0_7 = arith.constant 0 : index
    %c0_8 = arith.constant 0 : index
    %14 = vector.load %arg3[%c0_7, %c0_8] : memref<8x128xf32, #tpu.memory_space<vmem>>, vector<8x128xf32>
    %15 = vector.broadcast %0 : f32 to vector<8x128xf32>
    %16 = arith.mulf %14, %15 : vector<8x128xf32>
    %17 = vector.extract_strided_slice %13 {offsets = [0, 0], sizes = [8, 128], strides = [1, 1]} : vector<8x384xf32> to vector<8x128xf32>
    %18 = vector.broadcast %1 : f32 to vector<8x128xf32>
    %19 = arith.mulf %18, %17 : vector<8x128xf32>
    %20 = arith.addf %16, %19 : vector<8x128xf32>
    %c0_9 = arith.constant 0 : index
    %c0_10 = arith.constant 0 : index
    %21 = vector.load %arg7[%c0_9, %c0_10] : memref<8x128xf32, #tpu.memory_space<vmem>>, vector<8x128xf32>
    tpu.vector_store %arg7[%c0_9, %c0_10], %20 {strides = array<i32>} : memref<8x128xf32, #tpu.memory_space<vmem>>, vector<8x128xf32>,
    %c0_11 = arith.constant 0 : index
    %c0_12 = arith.constant 0 : index
    %22 = vector.load %arg4[%c0_11, %c0_12] : memref<8x128xf32, #tpu.memory_space<vmem>>, vector<8x128xf32>
    %23 = vector.broadcast %0 : f32 to vector<8x128xf32>
    %24 = arith.mulf %22, %23 : vector<8x128xf32>
    %25 = vector.extract_strided_slice %13 {offsets = [0, 128], sizes = [8, 128], strides = [1, 1]} : vector<8x384xf32> to vector<8x128xf32>
    %26 = vector.broadcast %1 : f32 to vector<8x128xf32>
    %27 = arith.mulf %26, %25 : vector<8x128xf32>
    %28 = arith.addf %24, %27 : vector<8x128xf32>
    %c0_13 = arith.constant 0 : index
    %c0_14 = arith.constant 0 : index
    %29 = vector.load %arg8[%c0_13, %c0_14] : memref<8x128xf32, #tpu.memory_space<vmem>>, vector<8x128xf32>
    tpu.vector_store %arg8[%c0_13, %c0_14], %28 {strides = array<i32>} : memref<8x128xf32, #tpu.memory_space<vmem>>, vector<8x128xf32>,
    %c0_15 = arith.constant 0 : index
    %c0_16 = arith.constant 0 : index
    %30 = vector.load %arg5[%c0_15, %c0_16] : memref<8x128xf32, #tpu.memory_space<vmem>>, vector<8x128xf32>
    %31 = vector.extract_strided_slice %13 {offsets = [0, 256], sizes = [8, 128], strides = [1, 1]} : vector<8x384xf32> to vector<8x128xf32>
    %32 = vector.broadcast %0 : f32 to vector<8x128xf32>
    %33 = arith.mulf %30, %32 : vector<8x128xf32>
    %34 = vector.broadcast %1 : f32 to vector<8x128xf32>
    %35 = arith.mulf %34, %31 : vector<8x128xf32>
    %36 = arith.addf %33, %35 : vector<8x128xf32>
    %cst_17 = arith.constant 1.000000e+03 : f32
    %37 = vector.broadcast %cst_17 : f32 to vector<8x128xf32>
    %38 = arith.cmpf oeq, %30, %37 : vector<8x128xf32>
    %cst_18 = arith.constant 1.000000e+03 : f32
    %39 = vector.broadcast %cst_18 : f32 to vector<8x128xf32>
    %40 = arith.cmpf oeq, %31, %39 : vector<8x128xf32>
    %cst_19 = arith.constant 1.000000e+03 : f32
    %41 = vector.broadcast %cst_19 : f32 to vector<8x128xf32>
    %42 = arith.select %40, %41, %31 : vector<8x128xi1>, vector<8x128xf32>
    %43 = arith.select %40, %30, %36 : vector<8x128xi1>, vector<8x128xf32>
    %44 = arith.select %38, %42, %43 : vector<8x128xi1>, vector<8x128xf32>
    %45 = tpu.iota {dimensions = array<i32: 1>} : vector<8x128xi32>
    %c8_i32 = arith.constant 8 : i32
    %46 = vector.broadcast %c8_i32 : i32 to vector<8x128xi32>
    %47 = arith.cmpi slt, %45, %46 : vector<8x128xi32>
    %48 = arith.select %47, %36, %44 : vector<8x128xi1>, vector<8x128xf32>
    %c0_20 = arith.constant 0 : index
    %c0_21 = arith.constant 0 : index
    %49 = vector.load %arg9[%c0_20, %c0_21] : memref<8x128xf32, #tpu.memory_space<vmem>>, vector<8x128xf32>
    tpu.vector_store %arg9[%c0_20, %c0_21], %48 {strides = array<i32>} : memref<8x128xf32, #tpu.memory_space<vmem>>, vector<8x128xf32>,
    return
  }
  func.func @transform_0(%arg0: i32, %arg1: memref<1xf32, #tpu.memory_space<smem>>) -> (i32, i32) {
    %c0_i32 = arith.constant 0 : i32
    %c0_i32_0 = arith.constant 0 : i32
    return %arg0, %c0_i32 : i32, i32
  }
  func.func @transform_1(%arg0: i32, %arg1: memref<1xf32, #tpu.memory_space<smem>>) -> (i32, i32) {
    %c0_i32 = arith.constant 0 : i32
    %c0_i32_0 = arith.constant 0 : i32
    return %arg0, %c0_i32 : i32, i32
  }
  func.func @transform_2(%arg0: i32, %arg1: memref<1xf32, #tpu.memory_space<smem>>) -> (i32, i32) {
    %c0_i32 = arith.constant 0 : i32
    %c0_i32_0 = arith.constant 0 : i32
    return %arg0, %c0_i32 : i32, i32
  }
  func.func @transform_3(%arg0: i32, %arg1: memref<1xf32, #tpu.memory_space<smem>>) -> (i32, i32) {
    %c0_i32 = arith.constant 0 : i32
    %c0_i32_0 = arith.constant 0 : i32
    return %arg0, %c0_i32 : i32, i32
  }
  func.func @transform_4(%arg0: i32, %arg1: memref<1xf32, #tpu.memory_space<smem>>) -> (i32, i32) {
    %c0_i32 = arith.constant 0 : i32
    %c0_i32_0 = arith.constant 0 : i32
    %c0_i32_1 = arith.constant 0 : i32
    return %c0_i32, %c0_i32_0 : i32, i32
  }
  func.func @transform_5(%arg0: i32, %arg1: memref<1xf32, #tpu.memory_space<smem>>) -> (i32, i32) {
    %c0_i32 = arith.constant 0 : i32
    %c0_i32_0 = arith.constant 0 : i32
    return %arg0, %c0_i32 : i32, i32
  }
  func.func @transform_6(%arg0: i32, %arg1: memref<1xf32, #tpu.memory_space<smem>>) -> (i32, i32) {
    %c0_i32 = arith.constant 0 : i32
    %c0_i32_0 = arith.constant 0 : i32
    return %arg0, %c0_i32 : i32, i32
  }
  func.func @transform_7(%arg0: i32, %arg1: memref<1xf32, #tpu.memory_space<smem>>) -> (i32, i32) {
    %c0_i32 = arith.constant 0 : i32
    %c0_i32_0 = arith.constant 0 : i32
    return %arg0, %c0_i32 : i32, i32
  }
}

</mosaic_0001>

<llo_original>
// kernel: mixup_yolo_pallas.1
$region0: #{mixup_yolo_pallas.1}
  #allocation0 [shape = 'u32[]', space=smem, size = 0x4, offset = 0x4, fixed_abs, tag = 'smem constant byte address 0x4 - core index']
  #allocation1 [shape = 'u32[72,128]{1,0:T(1,128)}', space=vmem, size = 0x9000, scoped, tag = 'internal scratch']
  #allocation2 [shape = 's32[1]{0}', space=sflag, size = 0x4, scoped, tag = 'scoped memory for mixup_yolo_pallas.1']
  #allocation3 [shape = 'f32[1]{0:T(128)S(6)}', space=smem, size = 0x200, scoped, tag = 'prefetched SMEM operand 0']
  %s0 = inlined_call_operand.<no memory space> [shape: f32[1], index: 0, kind: input, shape index: {}]
  %s1 = inlined_call_operand.vmem [shape: s32[16,1], index: 1, kind: input, shape index: {}]
  %s2 = inlined_call_operand.vmem [shape: f32[16,128], index: 2, kind: input, shape index: {}]
  %s3 = inlined_call_operand.vmem [shape: f32[16,128], index: 3, kind: input, shape index: {}]
  %s4 = inlined_call_operand.vmem [shape: f32[16,128], index: 4, kind: input, shape index: {}]
  %s5 = inlined_call_operand.vmem [shape: bf16[16,768], index: 5, kind: input, shape index: {}]
  %s6 = inlined_call_operand.hbm [shape: f32[16,128], index: 6, kind: output, shape index: {0}]
  %s7 = inlined_call_operand.hbm [shape: f32[16,128], index: 7, kind: output, shape index: {1}]
  %s8 = inlined_call_operand.vmem [shape: f32[16,128], index: 8, kind: output, shape index: {2}]
  %9 = xla_tuple %s6, %s7, %s8
  %s10 = sld [smem:[#allocation0]]
  $region69: #{mixup_yolo_pallas.1} parent=0
    _
  %s12 = ssub.s32 1, %s10
  %s13 = scalar_select 0, %s12, %s10
  %14 = sst [smem:[#allocation3]] %s0
  $region1: #{mixup_yolo_pallas.1} parent=0
    #allocation4 [shape = 'u8[8192]{0}', space=vmem, size = 0x2000, scoped, tag = 'output window, operand 0']
    #allocation5 [shape = 's32[2]{0}', space=sflag, size = 0x8, scoped, tag = 'scoped memory for mixup_yolo_pallas.1']
    #allocation6 [shape = 'u8[8192]{0}', space=vmem, size = 0x2000, scoped, tag = 'output window, operand 1']
    #allocation7 [shape = 's32[2]{0}', space=sflag, size = 0x8, scoped, tag = 'scoped memory for mixup_yolo_pallas.1']
    %15 = vsyncpa [#allocation5], 0
    %s16 = scalar_lea.sflag [#allocation5], 1
    %17 = vsyncpa %s16, 0
    %18 = vsyncpa [#allocation7], 0
    %s19 = scalar_lea.sflag [#allocation7], 1
    %20 = vsyncpa %s19, 0
    loop: start=0, step=1, limit=4
    $region2: #{mixup_yolo_pallas.1} parent=1 // loop_pre_header
      _
    $region3: #{mixup_yolo_pallas.1} parent=1 // loop_header
      %s22 = sphi 0, %s26
      %p23 = scmp.ge.s32.totalorder %s22, 4
      %s32 = sphi 0, %s34
      %s35 = sphi 0, %s32
      %s36 = sphi 0, %s35
      %s52 = sphi 0, %s36
      %s58 = sphi 0, %s60
      %s61 = sphi 0, %s58
      %s62 = sphi 0, %s61
      %s78 = sphi 0, %s62
      %s84 = sphi 0, %s86
      %s87 = sphi 0, %s84
      %s88 = sphi 0, %s87
      %s104 = sphi 0, %s88
      %s110 = sphi 0, %s112
      %s113 = sphi 0, %s110
      %s114 = sphi 0, %s113
      %s130 = sphi 0, %s114
      %s134 = sphi 0, %s134
      %s136 = sphi 0, %s134
      %s137 = sphi 0, %s136
      %s151 = sphi 0, %s137
      %s157 = sphi 0, %s159
      %s160 = sphi 0, %s157
      %s161 = sphi 0, %s160
      %s177 = sphi 0, %s161
      %s183 = sphi 0, %s185
      %s186 = sphi 0, %s183
      %s187 = sphi 0, %s186
      %s203 = sphi 0, %s187
      %s209 = sphi 0, %s211
      %s212 = sphi 0, %s209
      %s213 = sphi 0, %s212
      %s229 = sphi 0, %s213
    $region4: #{mixup_yolo_pallas.1} parent=1 // loop_header_branch
      %25 = sbr.rel (%p23) target = $region8
    $region5: #{mixup_yolo_pallas.1} parent=1 // loop_body
      %s27 = ssub.s32 %s22, 1
      %s28 = ssub.s32 %s22, 2
      %s29 = sadd.s32 %s22, 1
      %s30 = ssub.s32 %s22, %s29
      %p31 = scmp.eq.s32.totalorder %s30, 0
      %s33 = sadd.s32 %s32, 1
      %s34 = scalar_select %p31, %s32, %s33
      %p37 = pneg %p31
      %p38 = scmp.eq.s32.totalorder %s22, 1
      %p39 = por %p37, %p38
      %p40 = scmp.ne.s32.totalorder %s32, %s35
      %p41 = scmp.eq.s32.totalorder %s22, 0
      %p42 = por %p40, %p41
      %p43 = scmp.ne.s32.totalorder %s32, %s35
      %p44 = scmp.eq.s32.totalorder %s27, 1
      %p45 = por %p43, %p44
      %p46 = scmp.ne.s32.totalorder %s35, %s36
      %p47 = scmp.eq.s32.totalorder %s27, 0
      %p48 = por %p46, %p47
      %p49 = scmp.ne.s32.totalorder %s35, %s36
      %p50 = scmp.eq.s32.totalorder %s28, 1
      %p51 = por %p49, %p50
      %p53 = scmp.ne.s32.totalorder %s36, %s52
      %p54 = scmp.eq.s32.totalorder %s28, 0
      %p55 = por %p53, %p54
      %s56 = ssub.s32 %s22, %s29
      %p57 = scmp.eq.s32.totalorder %s56, 0
      %s59 = sadd.s32 %s58, 1
      %s60 = scalar_select %p57, %s58, %s59
      %p63 = pneg %p57
      %p64 = scmp.eq.s32.totalorder %s22, 1
      %p65 = por %p63, %p64
      %p66 = scmp.ne.s32.totalorder %s58, %s61
      %p67 = scmp.eq.s32.totalorder %s22, 0
      %p68 = por %p66, %p67
      %p69 = scmp.ne.s32.totalorder %s58, %s61
      %p70 = scmp.eq.s32.totalorder %s27, 1
      %p71 = por %p69, %p70
      %p72 = scmp.ne.s32.totalorder %s61, %s62
      %p73 = scmp.eq.s32.totalorder %s27, 0
      %p74 = por %p72, %p73
      %p75 = scmp.ne.s32.totalorder %s61, %s62
      %p76 = scmp.eq.s32.totalorder %s28, 1
      %p77 = por %p75, %p76
      %p79 = scmp.ne.s32.totalorder %s62, %s78
      %p80 = scmp.eq.s32.totalorder %s28, 0
      %p81 = por %p79, %p80
      %s82 = ssub.s32 %s22, %s29
      %p83 = scmp.eq.s32.totalorder %s82, 0
      %s85 = sadd.s32 %s84, 1
      %s86 = scalar_select %p83, %s84, %s85
      %p89 = pneg %p83
      %p90 = scmp.eq.s32.totalorder %s22, 1
      %p91 = por %p89, %p90
      %p92 = scmp.ne.s32.totalorder %s84, %s87
      %p93 = scmp.eq.s32.totalorder %s22, 0
      %p94 = por %p92, %p93
      %p95 = scmp.ne.s32.totalorder %s84, %s87
      %p96 = scmp.eq.s32.totalorder %s27, 1
      %p97 = por %p95, %p96
      %p98 = scmp.ne.s32.totalorder %s87, %s88
      %p99 = scmp.eq.s32.totalorder %s27, 0
      %p100 = por %p98, %p99
      %p101 = scmp.ne.s32.totalorder %s87, %s88
      %p102 = scmp.eq.s32.totalorder %s28, 1
      %p103 = por %p101, %p102
      %p105 = scmp.ne.s32.totalorder %s88, %s104
      %p106 = scmp.eq.s32.totalorder %s28, 0
      %p107 = por %p105, %p106
      %s108 = ssub.s32 %s22, %s29
      %p109 = scmp.eq.s32.totalorder %s108, 0
      %s111 = sadd.s32 %s110, 1
      %s112 = scalar_select %p109, %s110, %s111
      %p115 = pneg %p109
      %p116 = scmp.eq.s32.totalorder %s22, 1
      %p117 = por %p115, %p116
      %p118 = scmp.ne.s32.totalorder %s110, %s113
      %p119 = scmp.eq.s32.totalorder %s22, 0
      %p120 = por %p118, %p119
      %p121 = scmp.ne.s32.totalorder %s110, %s113
      %p122 = scmp.eq.s32.totalorder %s27, 1
      %p123 = por %p121, %p122
      %p124 = scmp.ne.s32.totalorder %s113, %s114
      %p125 = scmp.eq.s32.totalorder %s27, 0
      %p126 = por %p124, %p125
      %p127 = scmp.ne.s32.totalorder %s113, %s114
      %p128 = scmp.eq.s32.totalorder %s28, 1
      %p129 = por %p127, %p128
      %p131 = scmp.ne.s32.totalorder %s114, %s130
      %p132 = scmp.eq.s32.totalorder %s28, 0
      %p133 = por %p131, %p132
      %s135 = sadd.s32 %s134, 1
      %p138 = scmp.eq.s32.totalorder %s22, 1
      %p139 = scmp.ne.s32.totalorder %s134, %s136
      %p140 = scmp.eq.s32.totalorder %s22, 0
      %p141 = por %p139, %p140
      %p142 = scmp.ne.s32.totalorder %s134, %s136
      %p143 = scmp.eq.s32.totalorder %s27, 1
      %p144 = por %p142, %p143
      %p145 = scmp.ne.s32.totalorder %s136, %s137
      %p146 = scmp.eq.s32.totalorder %s27, 0
      %p147 = por %p145, %p146
      %p148 = scmp.ne.s32.totalorder %s136, %s137
      %p149 = scmp.eq.s32.totalorder %s28, 1
      %p150 = por %p148, %p149
      %p152 = scmp.ne.s32.totalorder %s137, %s151
      %p153 = scmp.eq.s32.totalorder %s28, 0
      %p154 = por %p152, %p153
      %s155 = ssub.s32 %s22, %s29
      %p156 = scmp.eq.s32.totalorder %s155, 0
      %s158 = sadd.s32 %s157, 1
      %s159 = scalar_select %p156, %s157, %s158
      %p162 = pneg %p156
      %p163 = scmp.eq.s32.totalorder %s22, 1
      %p164 = por %p162, %p163
      %p165 = scmp.ne.s32.totalorder %s157, %s160
      %p166 = scmp.eq.s32.totalorder %s22, 0
      %p167 = por %p165, %p166
      %p168 = scmp.ne.s32.totalorder %s157, %s160
      %p169 = scmp.eq.s32.totalorder %s27, 1
      %p170 = por %p168, %p169
      %p171 = scmp.ne.s32.totalorder %s160, %s161
      %p172 = scmp.eq.s32.totalorder %s27, 0
      %p173 = por %p171, %p172
      %p174 = scmp.ne.s32.totalorder %s160, %s161
      %p175 = scmp.eq.s32.totalorder %s28, 1
      %p176 = por %p174, %p175
      %p178 = scmp.ne.s32.totalorder %s161, %s177
      %p179 = scmp.eq.s32.totalorder %s28, 0
      %p180 = por %p178, %p179
      %s181 = ssub.s32 %s22, %s29
      %p182 = scmp.eq.s32.totalorder %s181, 0
      %s184 = sadd.s32 %s183, 1
      %s185 = scalar_select %p182, %s183, %s184
      %p188 = pneg %p182
      %p189 = scmp.eq.s32.totalorder %s22, 1
      %p190 = por %p188, %p189
      %p191 = scmp.ne.s32.totalorder %s183, %s186
      %p192 = scmp.eq.s32.totalorder %s22, 0
      %p193 = por %p191, %p192
      %p194 = scmp.ne.s32.totalorder %s183, %s186
      %p195 = scmp.eq.s32.totalorder %s27, 1
      %p196 = por %p194, %p195
      %p197 = scmp.ne.s32.totalorder %s186, %s187
      %p198 = scmp.eq.s32.totalorder %s27, 0
      %p199 = por %p197, %p198
      %p200 = scmp.ne.s32.totalorder %s186, %s187
      %p201 = scmp.eq.s32.totalorder %s28, 1
      %p202 = por %p200, %p201
      %p204 = scmp.ne.s32.totalorder %s187, %s203
      %p205 = scmp.eq.s32.totalorder %s28, 0
      %p206 = por %p204, %p205
      %s207 = ssub.s32 %s22, %s29
      %p208 = scmp.eq.s32.totalorder %s207, 0
      %s210 = sadd.s32 %s209, 1
      %s211 = scalar_select %p208, %s209, %s210
      %p214 = pneg %p208
      %p215 = scmp.eq.s32.totalorder %s22, 1
      %p216 = por %p214, %p215
      %p217 = scmp.ne.s32.totalorder %s209, %s212
      %p218 = scmp.eq.s32.totalorder %s22, 0
      %p219 = por %p217, %p218
      %p220 = scmp.ne.s32.totalorder %s209, %s212
      %p221 = scmp.eq.s32.totalorder %s27, 1
      %p222 = por %p220, %p221
      %p223 = scmp.ne.s32.totalorder %s212, %s213
      %p224 = scmp.eq.s32.totalorder %s27, 0
      %p225 = por %p223, %p224
      %p226 = scmp.ne.s32.totalorder %s212, %s213
      %p227 = scmp.eq.s32.totalorder %s28, 1
      %p228 = por %p226, %p227
      %p230 = scmp.ne.s32.totalorder %s213, %s229
      %p231 = scmp.eq.s32.totalorder %s28, 0
      %p232 = por %p230, %p231
      %p233 = scmp.le.s32.totalorder 1, %s22
      %p234 = scmp.lt.s32.totalorder %s22, 3
      %p235 = pnand %p233, %p234
      %p236 = pneg %p235
      // Predicated region
      $region9: #{mixup_yolo_pallas.1} parent=5 // pred_check
        _
      $region10: #{mixup_yolo_pallas.1} parent=5 // pred_check_branch
        %238 = sbr.rel (%p235) target = $region12
      $region11: #{mixup_yolo_pallas.1} parent=5 // pred_region
        %s239 = ssub.s32 %s22, 1
        // Predicated region
        $region13: #{mixup_yolo_pallas.1} parent=11 // pred_check
          %p240 = pneg %p147
        $region14: #{mixup_yolo_pallas.1} parent=11 // pred_check_branch
          %242 = sbr.rel (%p240) target = $region16
        $region15: #{mixup_yolo_pallas.1} parent=11 // pred_region
          _
        $region16: #{mixup_yolo_pallas.1} parent=11 // pred_fallthru
          _
      $region12: #{mixup_yolo_pallas.1} parent=5 // pred_fallthru
        _
      %p243 = scmp.lt.s32.totalorder %s22, 2
      // Predicated region
      $region17: #{mixup_yolo_pallas.1} parent=5 // pred_check
        %p244 = pneg %p243
      $region18: #{mixup_yolo_pallas.1} parent=5 // pred_check_branch
        %246 = sbr.rel (%p244) target = $region20
      $region19: #{mixup_yolo_pallas.1} parent=5 // pred_region
        // Predicated region
        $region21: #{mixup_yolo_pallas.1} parent=19 // pred_check
          %p247 = pneg %p42
        $region22: #{mixup_yolo_pallas.1} parent=19 // pred_check_branch
          %249 = sbr.rel (%p247) target = $region24
        $region23: #{mixup_yolo_pallas.1} parent=19 // pred_region
          %p250 = scmp.lt.s32.totalorder %s22, 1
          %s251 = scalar_select %p250, %s22, 1
          %s252 = smul.addr %s251, 8
          %s253 = scalar_lea.vmem %s1, %s252
        $region24: #{mixup_yolo_pallas.1} parent=19 // pred_fallthru
          _
        // Predicated region
        $region25: #{mixup_yolo_pallas.1} parent=19 // pred_check
          %p254 = pneg %p68
        $region26: #{mixup_yolo_pallas.1} parent=19 // pred_check_branch
          %256 = sbr.rel (%p254) target = $region28
        $region27: #{mixup_yolo_pallas.1} parent=19 // pred_region
          %p257 = scmp.lt.s32.totalorder %s22, 1
          %s258 = scalar_select %p257, %s22, 1
          %s259 = smul.addr %s258, 8
          %s260 = scalar_lea.vmem %s2, %s259
        $region28: #{mixup_yolo_pallas.1} parent=19 // pred_fallthru
          _
        // Predicated region
        $region29: #{mixup_yolo_pallas.1} parent=19 // pred_check
          %p261 = pneg %p94
        $region30: #{mixup_yolo_pallas.1} parent=19 // pred_check_branch
          %263 = sbr.rel (%p261) target = $region32
        $region31: #{mixup_yolo_pallas.1} parent=19 // pred_region
          %p264 = scmp.lt.s32.totalorder %s22, 1
          %s265 = scalar_select %p264, %s22, 1
          %s266 = smul.addr %s265, 8
          %s267 = scalar_lea.vmem %s3, %s266
        $region32: #{mixup_yolo_pallas.1} parent=19 // pred_fallthru
          _
        // Predicated region
        $region33: #{mixup_yolo_pallas.1} parent=19 // pred_check
          %p268 = pneg %p120
        $region34: #{mixup_yolo_pallas.1} parent=19 // pred_check_branch
          %270 = sbr.rel (%p268) target = $region36
        $region35: #{mixup_yolo_pallas.1} parent=19 // pred_region
          %p271 = scmp.lt.s32.totalorder %s22, 1
          %s272 = scalar_select %p271, %s22, 1
          %s273 = smul.addr %s272, 8
          %s274 = scalar_lea.vmem %s4, %s273
        $region36: #{mixup_yolo_pallas.1} parent=19 // pred_fallthru
          _
      $region20: #{mixup_yolo_pallas.1} parent=5 // pred_fallthru
        _
      %p275 = scmp.le.s32.totalorder 1, %s22
      %p276 = scmp.lt.s32.totalorder %s22, 3
      %p277 = pnand %p275, %p276
      %p278 = pneg %p277
      // Predicated region
      $region37: #{mixup_yolo_pallas.1} parent=5 // pred_check
        _
      $region38: #{mixup_yolo_pallas.1} parent=5 // pred_check_branch
        %280 = sbr.rel (%p277) target = $region40
      $region39: #{mixup_yolo_pallas.1} parent=5 // pred_region
        %s281 = ssub.s32 %s22, 1
        %p282 = scmp.lt.s32.totalorder %s27, 1
        %s283 = scalar_select %p282, %s27, 1
        %s284 = smul.addr %s283, 8
        %s285 = scalar_lea.vmem %s1, %s284
        %p286 = pneg %p48
        %p287 = pneg %p45
        %p288 = scmp.lt.s32.totalorder %s27, 1
        %s289 = scalar_select %p288, %s27, 1
        %s290 = smul.addr %s289, 8
        %s291 = scalar_lea.vmem %s2, %s290
        %p292 = pneg %p74
        %p293 = pneg %p71
        %p294 = scmp.lt.s32.totalorder %s27, 1
        %s295 = scalar_select %p294, %s27, 1
        %s296 = smul.addr %s295, 8
        %s297 = scalar_lea.vmem %s3, %s296
        %p298 = pneg %p100
        %p299 = pneg %p97
        %p300 = scmp.lt.s32.totalorder %s27, 1
        %s301 = scalar_select %p300, %s27, 1
        %s302 = smul.addr %s301, 8
        %s303 = scalar_lea.vmem %s4, %s302
        %p304 = pneg %p126
        %p305 = pneg %p123
        %p306 = pneg %p147
        %p307 = pneg %p144
        %p308 = pneg %p173
        %p309 = pneg %p170
        %s310 = sand.u32 %s160, 1
        %s311 = scalar_lea.sflag [#allocation5], %s310
        %s312 = sand.u32 %s160, 1
        %s313 = smul.addr %s312, 8
        %s314 = scalar_lea.vmem [#allocation4], %s313
        %p315 = pneg %p199
        %p316 = pneg %p196
        %s317 = sand.u32 %s186, 1
        %s318 = scalar_lea.sflag [#allocation7], %s317
        %s319 = sand.u32 %s186, 1
        %s320 = smul.addr %s319, 8
        %s321 = scalar_lea.vmem [#allocation6], %s320
        %p322 = pneg %p225
        %p323 = pneg %p222
        %p324 = scmp.lt.s32.totalorder %s27, 1
        %s325 = scalar_select %p324, %s27, 1
        %s326 = smul.addr %s325, 8
        %s327 = scalar_lea.vmem %s8, %s326
        %p328 = scmp.lt.s32.totalorder %s27, 1
        %s329 = scalar_select %p328, %s27, 1
        %s330 = smul.addr %s329, 8
        %s331 = scalar_lea.vmem %s1, %s330
        %p332 = scmp.lt.s32.totalorder %s27, 1
        %s333 = scalar_select %p332, %s27, 1
        %s334 = smul.addr %s333, 8
        %s335 = scalar_lea.vmem %s2, %s334
        %p336 = scmp.lt.s32.totalorder %s27, 1
        %s337 = scalar_select %p336, %s27, 1
        %s338 = smul.addr %s337, 8
        %s339 = scalar_lea.vmem %s3, %s338
        %p340 = scmp.lt.s32.totalorder %s27, 1
        %s341 = scalar_select %p340, %s27, 1
        %s342 = smul.addr %s341, 8
        %s343 = scalar_lea.vmem %s4, %s342
        %p344 = scmp.lt.s32.totalorder %s27, 1
        %s345 = scalar_select %p344, %s27, 1
        %s346 = smul.addr %s345, 8
        %s347 = scalar_lea.vmem %s8, %s346
        %s349 = sld [smem:[#allocation3]]
        %s350 = ssub.f32 1.0, %s349
        %v351 = vld [vmem:[%s331] sm:$0xff]
        %v352 = vlaneseq
        %v353 = vand.u32 %v352, 127
        %354 = vset.pattern.permute.xlu0 0
        %355 = vperm.xlu0 %354, %v351
        %v356 = vpop.permute.xlu0 %355
        %vm357 = vcmp.eq.s32.totalorder %v356, %v353
        %v358 = vsel %vm357, 1, 0
        %v359 = vcvt.s32.f32 %v358
        %v360 = vpack.c.bf16 %v359, %v359
        %v361 = vld [vmem:[%s5] sm:$0xff]
        %v362 = vld [vmem:[%s5 + $0x8] sm:$0xf]
        %v363 = vld [vmem:[%s5 + $0x18] sm:$0xff]
        %v364 = vld [vmem:[%s5 + $0x20] sm:$0xf]
        %v365 = vld [vmem:[%s5 + $0xc] sm:$0xff]
        %v366 = vld [vmem:[%s5 + $0x14] sm:$0xf]
        %v367 = vld [vmem:[%s5 + $0x24] sm:$0xff]
        %v368 = vld [vmem:[%s5 + $0x2c] sm:$0xf]
        %v373 = vunpack.c.l.b16 %v365
        %v374 = vunpack.c.h.b16 %v365
        %v375 = vunpack.c.l.b16 %v366
        %v376 = vunpack.c.l.b16 %v367
        %v377 = vunpack.c.h.b16 %v367
        %v378 = vunpack.c.l.b16 %v368
        %v379 = vpack.c.b16 %v376, %v373
        %v380 = vpack.c.b16 %v377, %v374
        %v381 = vpack.c.b16 %v378, %v375
        %vm385 = vcmask 130048
        %v387 = vsel %vm385, %v360, 0
        %389 = vmatpush.bf16.msra.mxu0 0
        %390 = vmatpush.bf16.msra.mxu0 0
        %391 = vmatpush.bf16.msra.mxu0 0
        %392 = vmatpush.bf16.msra.mxu0 0
        %393 = vmatpush.bf16.msra.mxu0 0
        %394 = vmatpush.bf16.msra.mxu0 0
        %395 = vmatpush.bf16.msra.mxu0 0
        %396 = vmatpush.bf16.msra.mxu0 %v379
        %397 = vmatmul.bf16.gmra.mxu0 %v387
        %v398 = vpop.f32.mrf.mxu0
        %v399 = vadd.f32 0.0, %v398
        %v400 = vpop.f32.mrf.mxu0
        %401 = vdwg.mxu0
        %402 = vmatpush.bf16.msra.mxu0 0
        %403 = vmatpush.bf16.msra.mxu0 0
        %404 = vmatpush.bf16.msra.mxu0 0
        %405 = vmatpush.bf16.msra.mxu0 0
        %406 = vmatpush.bf16.msra.mxu0 0
        %407 = vmatpush.bf16.msra.mxu0 0
        %408 = vmatpush.bf16.msra.mxu0 0
        %409 = vmatpush.bf16.msra.mxu0 %v380
        %410 = vmatmul.bf16.gmra.mxu0 %v387
        %v411 = vpop.f32.mrf.mxu0
        %v412 = vadd.f32 0.0, %v411
        %v413 = vpop.f32.mrf.mxu0
        %414 = vdwg.mxu0
        %415 = vmatpush.bf16.msra.mxu0 0
        %416 = vmatpush.bf16.msra.mxu0 0
        %417 = vmatpush.bf16.msra.mxu0 0
        %418 = vmatpush.bf16.msra.mxu0 0
        %419 = vmatpush.bf16.msra.mxu0 0
        %420 = vmatpush.bf16.msra.mxu0 0
        %421 = vmatpush.bf16.msra.mxu0 0
        %422 = vmatpush.bf16.msra.mxu0 %v381
        %423 = vmatmul.bf16.gmra.mxu0 %v387
        %v424 = vpop.f32.mrf.mxu0
        %v425 = vadd.f32 0.0, %v424
        %v426 = vpop.f32.mrf.mxu0
        %427 = vdwg.mxu0
        %v432 = vunpack.c.l.b16 %v361
        %v433 = vunpack.c.h.b16 %v361
        %v434 = vunpack.c.l.b16 %v362
        %v435 = vunpack.c.l.b16 %v363
        %v436 = vunpack.c.h.b16 %v363
        %v437 = vunpack.c.l.b16 %v364
        %v438 = vpack.c.b16 %v435, %v432
        %v439 = vpack.c.b16 %v436, %v433
        %v440 = vpack.c.b16 %v437, %v434
        %444 = vmatpush.bf16.msra.mxu0 0
        %445 = vmatpush.bf16.msra.mxu0 0
        %446 = vmatpush.bf16.msra.mxu0 0
        %447 = vmatpush.bf16.msra.mxu0 0
        %448 = vmatpush.bf16.msra.mxu0 0
        %449 = vmatpush.bf16.msra.mxu0 0
        %450 = vmatpush.bf16.msra.mxu0 0
        %451 = vmatpush.bf16.msra.mxu0 %v438
        %452 = vmatmul.bf16.gmra.mxu0 %v387
        %v453 = vpop.f32.mrf.mxu0
        %v454 = vadd.f32 %v399, %v453
        %v455 = vpop.f32.mrf.mxu0
        %456 = vdwg.mxu0
        %457 = vmatpush.bf16.msra.mxu0 0
        %458 = vmatpush.bf16.msra.mxu0 0
        %459 = vmatpush.bf16.msra.mxu0 0
        %460 = vmatpush.bf16.msra.mxu0 0
        %461 = vmatpush.bf16.msra.mxu0 0
        %462 = vmatpush.bf16.msra.mxu0 0
        %463 = vmatpush.bf16.msra.mxu0 0
        %464 = vmatpush.bf16.msra.mxu0 %v439
        %465 = vmatmul.bf16.gmra.mxu0 %v387
        %v466 = vpop.f32.mrf.mxu0
        %v467 = vadd.f32 %v412, %v466
        %v468 = vpop.f32.mrf.mxu0
        %469 = vdwg.mxu0
        %470 = vmatpush.bf16.msra.mxu0 0
        %471 = vmatpush.bf16.msra.mxu0 0
        %472 = vmatpush.bf16.msra.mxu0 0
        %473 = vmatpush.bf16.msra.mxu0 0
        %474 = vmatpush.bf16.msra.mxu0 0
        %475 = vmatpush.bf16.msra.mxu0 0
        %476 = vmatpush.bf16.msra.mxu0 0
        %477 = vmatpush.bf16.msra.mxu0 %v440
        %478 = vmatmul.bf16.gmra.mxu0 %v387
        %v479 = vpop.f32.mrf.mxu0
        %v480 = vadd.f32 %v425, %v479
        %v481 = vpop.f32.mrf.mxu0
        %482 = vdwg.mxu0
        %v483 = vld [vmem:[%s335] sm:$0xff]
        %v484 = vstv %s349
        %v485 = vmul.f32 %v483, %v484
        %v486 = vstv %s350
        %v487 = vmul.f32 %v486, %v454
        %v488 = vadd.f32 %v485, %v487
        %489 = vst [vmem:[%s314] sm:$0xff] %v488
        %v490 = vld [vmem:[%s339] sm:$0xff]
        %v491 = vmul.f32 %v490, %v484
        %v492 = vmul.f32 %v486, %v467
        %v493 = vadd.f32 %v491, %v492
        %494 = vst [vmem:[%s321] sm:$0xff] %v493
        %v495 = vld [vmem:[%s343] sm:$0xff]
        %v496 = vmul.f32 %v495, %v484
        %v497 = vmul.f32 %v486, %v480
        %v498 = vadd.f32 %v496, %v497
        %vm499 = vcmp.eq.f32.partialorder %v495, 1000.0
        %vm500 = vcmp.eq.f32.partialorder %v480, 1000.0
        %v501 = vsel %vm500, 1000.0, %v480
        %v502 = vsel %vm500, %v495, %v498
        %v503 = vsel %vm499, %v501, %v502
        %vm504 = vcmp.lt.s32.totalorder %v353, 8
        %v505 = vsel %vm504, %v498, %v503
        %506 = vst [vmem:[%s347] sm:$0xff] %v505
        %s507 = sand.u32 %s160, 1
        %s508 = scalar_lea.sflag [#allocation5], %s507
        %s509 = sand.u32 %s160, 1
        %s510 = smul.addr %s509, 8
        %s511 = scalar_lea.vmem [#allocation4], %s510
        %s512 = sand.u32 %s186, 1
        %s513 = scalar_lea.sflag [#allocation7], %s512
        %s514 = sand.u32 %s186, 1
        %s515 = smul.addr %s514, 8
        %s516 = scalar_lea.vmem [#allocation6], %s515
        %p517 = scmp.lt.s32.totalorder %s27, 1
        %s518 = scalar_select %p517, %s27, 1
        %s519 = smul.addr %s518, 8
        %s520 = scalar_lea.vmem %s8, %s519
        // Predicated region
        $region41: #{mixup_yolo_pallas.1} parent=39 // pred_check
          %p521 = pneg %p170
        $region42: #{mixup_yolo_pallas.1} parent=39 // pred_check_branch
          %523 = sbr.rel (%p521) target = $region44
        $region43: #{mixup_yolo_pallas.1} parent=39 // pred_region
          %525 = vsyncadd %s508, 0
          %s526 = smul.addr %s27, 8
          %s527 = scalar_lea.hbm %s6, %s526
          %s529 = sshll.u32 %s511, 4
          %s530 = int_to_ptr.vmem [resolvable:$true] %s529
          %s531 = sshll.u32 %s527, 4
          %s532 = int_to_ptr.hbm [resolvable:$true] %s531
          %534 = dma.vmem_to_hbm [thread:$0]  %s530, 128, %s532, %s508
        $region44: #{mixup_yolo_pallas.1} parent=39 // pred_fallthru
          _
        // Predicated region
        $region45: #{mixup_yolo_pallas.1} parent=39 // pred_check
          %p535 = pneg %p196
        $region46: #{mixup_yolo_pallas.1} parent=39 // pred_check_branch
          %537 = sbr.rel (%p535) target = $region48
        $region47: #{mixup_yolo_pallas.1} parent=39 // pred_region
          %539 = vsyncadd %s513, 0
          %s540 = smul.addr %s27, 8
          %s541 = scalar_lea.hbm %s7, %s540
          %s543 = sshll.u32 %s516, 4
          %s544 = int_to_ptr.vmem [resolvable:$true] %s543
          %s545 = sshll.u32 %s541, 4
          %s546 = int_to_ptr.hbm [resolvable:$true] %s545
          %548 = dma.vmem_to_hbm [thread:$0]  %s544, 128, %s546, %s513
        $region48: #{mixup_yolo_pallas.1} parent=39 // pred_fallthru
          _
        // Predicated region
        $region49: #{mixup_yolo_pallas.1} parent=39 // pred_check
          %p549 = pneg %p222
        $region50: #{mixup_yolo_pallas.1} parent=39 // pred_check_branch
          %551 = sbr.rel (%p549) target = $region52
        $region51: #{mixup_yolo_pallas.1} parent=39 // pred_region
          _
        $region52: #{mixup_yolo_pallas.1} parent=39 // pred_fallthru
          _
      $region40: #{mixup_yolo_pallas.1} parent=5 // pred_fallthru
        _
      %p552 = scmp.le.s32.totalorder 2, %s22
      // Predicated region
      $region53: #{mixup_yolo_pallas.1} parent=5 // pred_check
        %p553 = pneg %p552
      $region54: #{mixup_yolo_pallas.1} parent=5 // pred_check_branch
        %555 = sbr.rel (%p553) target = $region56
      $region55: #{mixup_yolo_pallas.1} parent=5 // pred_region
        %s556 = ssub.s32 %s22, 2
        // Predicated region
        $region57: #{mixup_yolo_pallas.1} parent=55 // pred_check
          %p557 = pneg %p176
        $region58: #{mixup_yolo_pallas.1} parent=55 // pred_check_branch
          %559 = sbr.rel (%p557) target = $region60
        $region59: #{mixup_yolo_pallas.1} parent=55 // pred_region
          %s560 = sand.u32 %s161, 1
          %s561 = scalar_lea.sflag [#allocation5], %s560
          %s562 = sand.u32 %s161, 1
          %s563 = smul.addr %s562, 8
          %s564 = scalar_lea.vmem [#allocation4], %s563
          %566 = dma.done %s561, 128
        $region60: #{mixup_yolo_pallas.1} parent=55 // pred_fallthru
          _
        // Predicated region
        $region61: #{mixup_yolo_pallas.1} parent=55 // pred_check
          %p567 = pneg %p202
        $region62: #{mixup_yolo_pallas.1} parent=55 // pred_check_branch
          %569 = sbr.rel (%p567) target = $region64
        $region63: #{mixup_yolo_pallas.1} parent=55 // pred_region
          %s570 = sand.u32 %s187, 1
          %s571 = scalar_lea.sflag [#allocation7], %s570
          %s572 = sand.u32 %s187, 1
          %s573 = smul.addr %s572, 8
          %s574 = scalar_lea.vmem [#allocation6], %s573
          %576 = dma.done %s571, 128
        $region64: #{mixup_yolo_pallas.1} parent=55 // pred_fallthru
          _
        // Predicated region
        $region65: #{mixup_yolo_pallas.1} parent=55 // pred_check
          %p577 = pneg %p228
        $region66: #{mixup_yolo_pallas.1} parent=55 // pred_check_branch
          %579 = sbr.rel (%p577) target = $region68
        $region67: #{mixup_yolo_pallas.1} parent=55 // pred_region
          %p580 = scmp.lt.s32.totalorder %s28, 1
          %s581 = scalar_select %p580, %s28, 1
          %s582 = smul.addr %s581, 8
          %s583 = scalar_lea.vmem %s8, %s582
        $region68: #{mixup_yolo_pallas.1} parent=55 // pred_fallthru
          _
      $region56: #{mixup_yolo_pallas.1} parent=5 // pred_fallthru
        _
    $region6: #{mixup_yolo_pallas.1} parent=1 // loop_footer
      %s26 = sadd.s32 1, %s22
    $region7: #{mixup_yolo_pallas.1} parent=1 // loop_footer_branch
      %21 = sbr.rel target = $region3
    $region8: #{mixup_yolo_pallas.1} parent=1 // loop_exit
      _
    %584 = vsyncpa [#allocation5], 1
    %s585 = scalar_lea.sflag [#allocation5], 1
    %586 = vsyncpa %s585, 1
    %587 = vsyncpa [#allocation7], 1
    %s588 = scalar_lea.sflag [#allocation7], 1
    %589 = vsyncpa %s588, 1

</llo_original>
